<compile_context>
chip_gen: v7x
topology: tpu7x:2x2x1
jax: 0.10.0
libtpu: 0.0.40
codegen_flags: <defaults>
</compile_context>

<pallas_src>
import functools

import jax
import jax.numpy as jnp
from jax.experimental import pallas as pl
from jax.experimental.pallas import tpu as pltpu

_LANE = 128  # padded lane width of the packed embedding-table operand (>= 50)


def _pos_embed_kernel(tbl_ref, out_ref, *, W, HW, inv_w):
    # tbl_ref: (D2, _LANE)  program 0: col_embed[:W].T zero-padded to 128 lanes
    #                       program 1: row_embed[:H].T zero-padded to 128 lanes
    # out_ref: (D2, HW)     program 0: channels [0, D2)    (col half)
    #                       program 1: channels [D2, 2*D2) (row half)
    lane = jax.lax.broadcasted_iota(jnp.int32, (_LANE, HW), 1).astype(jnp.float32)
    sub = jax.lax.broadcasted_iota(jnp.int32, (_LANE, HW), 0).astype(jnp.float32)

    # Exact (h, w) decomposition of the flat index l = h*W + w, in f32.
    # (l + 0.5) * (1/W) keeps the true value >= 0.5/W away from any integer,
    # so floor() is exact despite the rounded reciprocal (l < 2500, W <= 50).
    h_idx = jnp.floor((lane + 0.5) * inv_w)
    w_idx = lane - h_idx * W

    # Program 0 gathers by w (col embedding), program 1 by h (row embedding).
    prog_f = pl.program_id(0).astype(jnp.float32)            # 0.0 or 1.0
    target = (1.0 - prog_f) * w_idx + prog_f * h_idx

    sel = (target == sub).astype(tbl_ref.dtype)              # one-hot (_LANE, HW)

    # One-hot "gather" on the MXU; exact because sel entries are 0/1 and the
    # accumulation / precision is f32 (HIGHEST avoids any bf16 demotion).
    out = jnp.dot(
        tbl_ref[...],
        sel,
        preferred_element_type=jnp.float32,
        precision=jax.lax.Precision.HIGHEST,
    )
    out_ref[...] = out.astype(out_ref.dtype)


def position_embedding_learned(x, col_weight, row_weight, out_dtype=None):
    """x: (B, C, H, W). Returns pos: (B, num_pos_feats, H, W) in NCHW, like PyTorch."""
    B = x.shape[0]
    H, W = int(x.shape[-2]), int(x.shape[-1])
    n_emb, D2 = col_weight.shape
    D = 2 * D2

    if col_weight.dtype != row_weight.dtype:
        raise ValueError("col_embed and row_embed weights must share a dtype.")
    if H > n_emb or W > n_emb:
        raise ValueError(
            f"H={H}, W={W} exceed embedding table size {n_emb} "
            "(matches nn.Embedding index-range requirement).")
    if D2 % 8 != 0:
        raise ValueError(
            f"num_pos_feats//2={D2} must be a multiple of 8 (TPU sublane tiling "
            "of the per-half output block).")

    out_dtype = col_weight.dtype if out_dtype is None else out_dtype
    HW = H * W

    # Tiny constant-table prep in XLA (free): pack both transposed, zero-padded
    # tables into one (2*D2, 128) operand.  Rows [0, D2) = col table (indexed
    # by w), rows [D2, 2*D2) = row table (indexed by h).  Zero padding is
    # harmless: padded columns are never selected by the one-hot matrix.
    tbl = jnp.zeros((D, _LANE), dtype=col_weight.dtype)
    tbl = tbl.at[:D2, :W].set(col_weight[:W, :].T)
    tbl = tbl.at[D2:, :H].set(row_weight[:H, :].T)

    kernel = functools.partial(_pos_embed_kernel, W=W, HW=HW, inv_w=1.0 / W)

    pos_flat = pl.pallas_call(
        kernel,
        out_shape=jax.ShapeDtypeStruct((D, HW), out_dtype),
        grid=(2,),
        in_specs=[pl.BlockSpec((D2, _LANE), lambda i: (i, 0))],
        out_specs=pl.BlockSpec((D2, HW), lambda i: (i, 0)),
        compiler_params=pltpu.CompilerParams(
            dimension_semantics=("parallel",)),
    )(tbl)

    # Free contiguous reshape back to spatial layout; broadcast over the batch
    # outside the kernel so it can fuse into the consumer (no B-way HBM write).
    pos = pos_flat.reshape(D, H, W)
    return jnp.broadcast_to(pos[None], (B, D, H, W))


def _reference(x, col_weight, row_weight):
    B = x.shape[0]
    H, W = x.shape[-2], x.shape[-1]
    x_emb = col_weight[:W, :]                                   # (W, D2)
    y_emb = row_weight[:H, :]                                   # (H, D2)
    pos = jnp.concatenate(
        [
            jnp.broadcast_to(x_emb[None, :, :], (H, W, x_emb.shape[-1])),
            jnp.broadcast_to(y_emb[:, None, :], (H, W, y_emb.shape[-1])),
        ],
        axis=-1,
    )                                                           # (H, W, D)
    pos = jnp.transpose(pos, (2, 0, 1))[None]                   # (1, D, H, W)
    return jnp.broadcast_to(pos, (B,) + pos.shape[1:])


if __name__ == "__main__":
    num_pos_feats = 32           # -> embedding tables (50, 16)
    B, C, H, W = 2, 4, 16, 16

    key = jax.random.PRNGKey(0)
    k_x, k_row, k_col = jax.random.split(key, 3)

    x = jax.random.normal(k_x, (B, C, H, W), dtype=jnp.float32)
    # nn.init.uniform_ -> U[0, 1)
    row_weight = jax.random.uniform(k_row, (50, num_pos_feats // 2), dtype=jnp.float32)
    col_weight = jax.random.uniform(k_col, (50, num_pos_feats // 2), dtype=jnp.float32)

    pos = position_embedding_learned(x, col_weight, row_weight)
    pos = jax.block_until_ready(pos)

    ref = _reference(x, col_weight, row_weight)
    assert pos.shape == (B, num_pos_feats, H, W)
    assert jnp.allclose(pos, ref), "mismatch vs pure-JAX reference"

    print("KERNEL_OK")
</pallas_src>

<mosaic_0001>
module attributes {stable_mosaic.version = 11 : i64} {
  func.func @_pos_embed_kernel(%arg0: i32, %arg1: memref<16x128xf32, #tpu.memory_space<vmem>>, %arg2: memref<16x256xf32, #tpu.memory_space<vmem>>) attributes {dimension_semantics = [#tpu.dimension_semantics<parallel>], iteration_bounds = array<i64: 2>, scalar_prefetch = 0 : i64, scratch_operands = 0 : i64, tpu.core_type = #tpu.core_type<tc>, window_params = [{transform_indices = @transform_0, window_bounds = array<i64: 16, 128>}, {transform_indices = @transform_1, window_bounds = array<i64: 16, 256>}]} {
    %0 = tpu.iota {dimensions = array<i32: 1>} : vector<128x256xi32>
    %1 = arith.sitofp %0 : vector<128x256xi32> to vector<128x256xf32>
    %2 = tpu.iota {dimensions = array<i32: 0>} : vector<128x256xi32>
    %3 = arith.sitofp %2 : vector<128x256xi32> to vector<128x256xf32>
    %cst = arith.constant 5.000000e-01 : f32
    %4 = vector.broadcast %cst : f32 to vector<128x256xf32>
    %5 = arith.addf %1, %4 : vector<128x256xf32>
    %cst_0 = arith.constant 6.250000e-02 : f32
    %6 = vector.broadcast %cst_0 : f32 to vector<128x256xf32>
    %7 = arith.mulf %5, %6 : vector<128x256xf32>
    %8 = math.floor %7 : vector<128x256xf32>
    %cst_1 = arith.constant 1.600000e+01 : f32
    %9 = vector.broadcast %cst_1 : f32 to vector<128x256xf32>
    %10 = arith.mulf %8, %9 : vector<128x256xf32>
    %11 = arith.subf %1, %10 : vector<128x256xf32>
    %12 = arith.sitofp %arg0 : i32 to f32
    %cst_2 = arith.constant 1.000000e+00 : f32
    %13 = arith.subf %cst_2, %12 : f32
    %14 = vector.broadcast %13 : f32 to vector<128x256xf32>
    %15 = arith.mulf %14, %11 : vector<128x256xf32>
    %16 = vector.broadcast %12 : f32 to vector<128x256xf32>
    %17 = arith.mulf %16, %8 : vector<128x256xf32>
    %18 = arith.addf %15, %17 : vector<128x256xf32>
    %19 = arith.cmpf oeq, %18, %3 : vector<128x256xf32>
    %20 = arith.extui %19 : vector<128x256xi1> to vector<128x256xi32>
    %21 = arith.sitofp %20 : vector<128x256xi32> to vector<128x256xf32>
    %c0 = arith.constant 0 : index
    %c0_3 = arith.constant 0 : index
    %22 = vector.load %arg1[%c0, %c0_3] : memref<16x128xf32, #tpu.memory_space<vmem>>, vector<16x128xf32>
    %cst_4 = arith.constant dense<0.000000e+00> : vector<16x256xf32>
    %23 = tpu.matmul %22, %21, %cst_4 {dimension_numbers = #tpu.dot_dimension_numbers<[1], [0], [0], [1], [0, 0, 1, 1], [], []>, precision = #tpu.contract_precision<fp32>} : vector<16x128xf32>, vector<128x256xf32>, vector<16x256xf32> -> vector<16x256xf32>
    %c0_5 = arith.constant 0 : index
    %c0_6 = arith.constant 0 : index
    %24 = vector.load %arg2[%c0_5, %c0_6] : memref<16x256xf32, #tpu.memory_space<vmem>>, vector<16x256xf32>
    tpu.vector_store %arg2[%c0_5, %c0_6], %23 {strides = array<i32>} : memref<16x256xf32, #tpu.memory_space<vmem>>, vector<16x256xf32>,
    return
  }
  func.func @transform_0(%arg0: i32) -> (i32, i32) {
    %c0_i32 = arith.constant 0 : i32
    %c0_i32_0 = arith.constant 0 : i32
    return %arg0, %c0_i32 : i32, i32
  }
  func.func @transform_1(%arg0: i32) -> (i32, i32) {
    %c0_i32 = arith.constant 0 : i32
    %c0_i32_0 = arith.constant 0 : i32
    return %arg0, %c0_i32 : i32, i32
  }
}

</mosaic_0001>

<llo_original>
// kernel: tpu_custom_call.1
$region0: #{tpu_custom_call.1}
  #allocation0 [shape = 'u32[]', space=smem, size = 0x4, offset = 0x4, fixed_abs, tag = 'smem constant byte address 0x4 - core index']
  #allocation1 [shape = 'u32[144,128]{1,0:T(1,128)}', space=vmem, size = 0x12000, scoped, tag = 'internal scratch']
  %s0 = inlined_call_operand.hbm [shape: f32[32,128], index: 0, kind: input, shape index: {}]
  %s1 = inlined_call_operand.hbm [shape: f32[32,256], index: 1, kind: output, shape index: {}]
  %s2 = sld [smem:[#allocation0]]
  $region41: #{tpu_custom_call.1} parent=0
    _
  %s4 = ssub.s32 1, %s2
  %s5 = scalar_select 0, %s4, %s2
  $region1: #{tpu_custom_call.1} parent=0
    #allocation2 [shape = 'u8[16384]{0}', space=vmem, size = 0x4000, scoped, tag = 'input window, operand 0']
    #allocation3 [shape = 's32[2]{0}', space=sflag, size = 0x8, scoped, tag = 'scoped memory for tpu_custom_call.1']
    #allocation4 [shape = 's32[2]{0}', space=sflag, size = 0x8, scoped, tag = 'scoped memory for tpu_custom_call.1']
    #allocation5 [shape = 'u8[32768]{0}', space=vmem, size = 0x8000, scoped, tag = 'output window, operand 0']
    %6 = vsyncpa [#allocation3], 0
    %s7 = scalar_lea.sflag [#allocation3], 1
    %8 = vsyncpa %s7, 0
    %9 = vsyncpa [#allocation4], 0
    %s10 = scalar_lea.sflag [#allocation4], 1
    %11 = vsyncpa %s10, 0
    loop: start=0, step=1, limit=4
    $region2: #{tpu_custom_call.1} parent=1 // loop_pre_header
      _
    $region3: #{tpu_custom_call.1} parent=1 // loop_header
      %s13 = sphi 0, %s17
      %p14 = scmp.ge.s32.totalorder %s13, 4
      %s23 = sphi 0, %s25
      %s26 = sphi 0, %s23
      %s27 = sphi 0, %s26
      %s43 = sphi 0, %s27
      %s49 = sphi 0, %s51
      %s52 = sphi 0, %s49
      %s53 = sphi 0, %s52
      %s69 = sphi 0, %s53
    $region4: #{tpu_custom_call.1} parent=1 // loop_header_branch
      %16 = sbr.rel (%p14) target = $region8
    $region5: #{tpu_custom_call.1} parent=1 // loop_body
      %s18 = ssub.s32 %s13, 1
      %s19 = ssub.s32 %s13, 2
      %s20 = sadd.s32 %s13, 1
      %s21 = ssub.s32 %s13, %s20
      %p22 = scmp.eq.s32.totalorder %s21, 0
      %s24 = sadd.s32 %s23, 1
      %s25 = scalar_select %p22, %s23, %s24
      %p28 = pneg %p22
      %p29 = scmp.eq.s32.totalorder %s13, 1
      %p30 = por %p28, %p29
      %p31 = scmp.ne.s32.totalorder %s23, %s26
      %p32 = scmp.eq.s32.totalorder %s13, 0
      %p33 = por %p31, %p32
      %p34 = scmp.ne.s32.totalorder %s23, %s26
      %p35 = scmp.eq.s32.totalorder %s18, 1
      %p36 = por %p34, %p35
      %p37 = scmp.ne.s32.totalorder %s26, %s27
      %p38 = scmp.eq.s32.totalorder %s18, 0
      %p39 = por %p37, %p38
      %p40 = scmp.ne.s32.totalorder %s26, %s27
      %p41 = scmp.eq.s32.totalorder %s19, 1
      %p42 = por %p40, %p41
      %p44 = scmp.ne.s32.totalorder %s27, %s43
      %p45 = scmp.eq.s32.totalorder %s19, 0
      %p46 = por %p44, %p45
      %s47 = ssub.s32 %s13, %s20
      %p48 = scmp.eq.s32.totalorder %s47, 0
      %s50 = sadd.s32 %s49, 1
      %s51 = scalar_select %p48, %s49, %s50
      %p54 = pneg %p48
      %p55 = scmp.eq.s32.totalorder %s13, 1
      %p56 = por %p54, %p55
      %p57 = scmp.ne.s32.totalorder %s49, %s52
      %p58 = scmp.eq.s32.totalorder %s13, 0
      %p59 = por %p57, %p58
      %p60 = scmp.ne.s32.totalorder %s49, %s52
      %p61 = scmp.eq.s32.totalorder %s18, 1
      %p62 = por %p60, %p61
      %p63 = scmp.ne.s32.totalorder %s52, %s53
      %p64 = scmp.eq.s32.totalorder %s18, 0
      %p65 = por %p63, %p64
      %p66 = scmp.ne.s32.totalorder %s52, %s53
      %p67 = scmp.eq.s32.totalorder %s19, 1
      %p68 = por %p66, %p67
      %p70 = scmp.ne.s32.totalorder %s53, %s69
      %p71 = scmp.eq.s32.totalorder %s19, 0
      %p72 = por %p70, %p71
      %p73 = scmp.le.s32.totalorder 1, %s13
      %p74 = scmp.lt.s32.totalorder %s13, 3
      %p75 = pnand %p73, %p74
      %p76 = pneg %p75
      // Predicated region
      $region9: #{tpu_custom_call.1} parent=5 // pred_check
        _
      $region10: #{tpu_custom_call.1} parent=5 // pred_check_branch
        %78 = sbr.rel (%p75) target = $region12
      $region11: #{tpu_custom_call.1} parent=5 // pred_region
        %s79 = ssub.s32 %s13, 1
      $region12: #{tpu_custom_call.1} parent=5 // pred_fallthru
        _
      %p80 = scmp.lt.s32.totalorder %s13, 2
      // Predicated region
      $region13: #{tpu_custom_call.1} parent=5 // pred_check
        %p81 = pneg %p80
      $region14: #{tpu_custom_call.1} parent=5 // pred_check_branch
        %83 = sbr.rel (%p81) target = $region16
      $region15: #{tpu_custom_call.1} parent=5 // pred_region
        // Predicated region
        $region17: #{tpu_custom_call.1} parent=15 // pred_check
          %p84 = pneg %p33
        $region18: #{tpu_custom_call.1} parent=15 // pred_check_branch
          %86 = sbr.rel (%p84) target = $region20
        $region19: #{tpu_custom_call.1} parent=15 // pred_region
          %s87 = sand.u32 %s23, 1
          %s88 = scalar_lea.sflag [#allocation3], %s87
          %s89 = sand.u32 %s23, 1
          %s90 = smul.addr %s89, 16
          %s91 = scalar_lea.vmem [#allocation2], %s90
          %s92 = smul.u32 2, %s13
          %s94 = ssub.s32 256, 256
          %95 = vsyncadd %s88, %s94
          %s96 = smul.addr %s92, 128
          %s97 = scalar_lea.hbm %s0, %s96
          %s98 = sshll.u32 %s91, 4
          %s99 = int_to_ptr.vmem [resolvable:$true] %s98
          %104 = dma.hbm_to_vmem [thread:$0]  %s97, 256, %s99, %s88, 128, 128, 8
        $region20: #{tpu_custom_call.1} parent=15 // pred_fallthru
          _
      $region16: #{tpu_custom_call.1} parent=5 // pred_fallthru
        _
      %p105 = scmp.le.s32.totalorder 1, %s13
      %p106 = scmp.lt.s32.totalorder %s13, 3
      %p107 = pnand %p105, %p106
      %p108 = pneg %p107
      // Predicated region
      $region21: #{tpu_custom_call.1} parent=5 // pred_check
        _
      $region22: #{tpu_custom_call.1} parent=5 // pred_check_branch
        %110 = sbr.rel (%p107) target = $region24
      $region23: #{tpu_custom_call.1} parent=5 // pred_region
        %s111 = ssub.s32 %s13, 1
        %s112 = sand.u32 %s26, 1
        %s113 = scalar_lea.sflag [#allocation3], %s112
        %s114 = sand.u32 %s26, 1
        %s115 = smul.addr %s114, 16
        %s116 = scalar_lea.vmem [#allocation2], %s115
        // Predicated region
        $region25: #{tpu_custom_call.1} parent=23 // pred_check
          %p117 = pneg %p39
        $region26: #{tpu_custom_call.1} parent=23 // pred_check_branch
          %119 = sbr.rel (%p117) target = $region28
        $region27: #{tpu_custom_call.1} parent=23 // pred_region
          %120 = dma.done %s113, 256
        $region28: #{tpu_custom_call.1} parent=23 // pred_fallthru
          _
        %s121 = sand.u32 %s26, 1
        %s122 = scalar_lea.sflag [#allocation3], %s121
        %s123 = sand.u32 %s26, 1
        %s124 = smul.addr %s123, 16
        %s125 = scalar_lea.vmem [#allocation2], %s124
        %p126 = pneg %p39
        %p127 = pneg %p36
        %p128 = pneg %p65
        %p129 = pneg %p62
        %s130 = sand.u32 %s52, 1
        %s131 = scalar_lea.sflag [#allocation4], %s130
        %s132 = sand.u32 %s52, 1
        %s133 = smul.addr %s132, 32
        %s134 = scalar_lea.vmem [#allocation5], %s133
        %s135 = smul.u32 2, %s18
        %s136 = smul.u32 2, %s18
        %v137 = vlaneseq
        %v138 = vand.u32 %v137, 127
        %v139 = vadd.s32 %v138, 128
        %v140 = vcvt.s32.f32 %v138
        %v141 = vcvt.s32.f32 %v139
        %v142 = vlaneseq
        %v143 = vshrl.u32 %v142, 7
        %v144 = vadd.s32 %v143, 8
        %v145 = vadd.s32 %v143, 16
        %v146 = vadd.s32 %v143, 24
        %v147 = vadd.s32 %v143, 32
        %v148 = vadd.s32 %v143, 40
        %v149 = vadd.s32 %v143, 48
        %v150 = vadd.s32 %v143, 56
        %v151 = vadd.s32 %v143, 64
        %v152 = vadd.s32 %v143, 72
        %v153 = vadd.s32 %v143, 80
        %v154 = vadd.s32 %v143, 88
        %v155 = vadd.s32 %v143, 96
        %v156 = vadd.s32 %v143, 104
        %v157 = vadd.s32 %v143, 112
        %v158 = vadd.s32 %v143, 120
        %v159 = vcvt.s32.f32 %v143
        %v160 = vcvt.s32.f32 %v144
        %v161 = vcvt.s32.f32 %v145
        %v162 = vcvt.s32.f32 %v146
        %v163 = vcvt.s32.f32 %v147
        %v164 = vcvt.s32.f32 %v148
        %v165 = vcvt.s32.f32 %v149
        %v166 = vcvt.s32.f32 %v150
        %v167 = vcvt.s32.f32 %v151
        %v168 = vcvt.s32.f32 %v152
        %v169 = vcvt.s32.f32 %v153
        %v170 = vcvt.s32.f32 %v154
        %v171 = vcvt.s32.f32 %v155
        %v172 = vcvt.s32.f32 %v156
        %v173 = vcvt.s32.f32 %v157
        %v174 = vcvt.s32.f32 %v158
        %v175 = vadd.f32 %v140, 0.5
        %v176 = vadd.f32 %v141, 0.5
        %v177 = vmul.f32 %v175, 0.0625
        %v178 = vmul.f32 %v176, 0.0625
        %v179 = vfloor.f32 %v177
        %v180 = vfloor.f32 %v178
        %v181 = vmul.f32 %v179, 16.0
        %v182 = vmul.f32 %v180, 16.0
        %v183 = vsub.f32 %v140, %v181
        %v184 = vsub.f32 %v141, %v182
        %s185 = scvt.s32.f32 %s18
        %s186 = ssub.f32 1.0, %s185
        %v187 = vstv %s186
        %v188 = vmul.f32 %v187, %v183
        %v189 = vmul.f32 %v187, %v184
        %v190 = vstv %s185
        %v191 = vmul.f32 %v190, %v179
        %v192 = vmul.f32 %v190, %v180
        %v193 = vadd.f32 %v188, %v191
        %v194 = vadd.f32 %v189, %v192
        %vm195 = vcmp.eq.f32.partialorder %v193, %v159
        %vm196 = vcmp.eq.f32.partialorder %v194, %v159
        %vm197 = vcmp.eq.f32.partialorder %v193, %v160
        %vm198 = vcmp.eq.f32.partialorder %v194, %v160
        %vm199 = vcmp.eq.f32.partialorder %v193, %v161
        %vm200 = vcmp.eq.f32.partialorder %v194, %v161
        %vm201 = vcmp.eq.f32.partialorder %v193, %v162
        %vm202 = vcmp.eq.f32.partialorder %v194, %v162
        %vm203 = vcmp.eq.f32.partialorder %v193, %v163
        %vm204 = vcmp.eq.f32.partialorder %v194, %v163
        %vm205 = vcmp.eq.f32.partialorder %v193, %v164
        %vm206 = vcmp.eq.f32.partialorder %v194, %v164
        %vm207 = vcmp.eq.f32.partialorder %v193, %v165
        %vm208 = vcmp.eq.f32.partialorder %v194, %v165
        %vm209 = vcmp.eq.f32.partialorder %v193, %v166
        %vm210 = vcmp.eq.f32.partialorder %v194, %v166
        %vm211 = vcmp.eq.f32.partialorder %v193, %v167
        %vm212 = vcmp.eq.f32.partialorder %v194, %v167
        %vm213 = vcmp.eq.f32.partialorder %v193, %v168
        %vm214 = vcmp.eq.f32.partialorder %v194, %v168
        %vm215 = vcmp.eq.f32.partialorder %v193, %v169
        %vm216 = vcmp.eq.f32.partialorder %v194, %v169
        %vm217 = vcmp.eq.f32.partialorder %v193, %v170
        %vm218 = vcmp.eq.f32.partialorder %v194, %v170
        %vm219 = vcmp.eq.f32.partialorder %v193, %v171
        %vm220 = vcmp.eq.f32.partialorder %v194, %v171
        %vm221 = vcmp.eq.f32.partialorder %v193, %v172
        %vm222 = vcmp.eq.f32.partialorder %v194, %v172
        %vm223 = vcmp.eq.f32.partialorder %v193, %v173
        %vm224 = vcmp.eq.f32.partialorder %v194, %v173
        %vm225 = vcmp.eq.f32.partialorder %v193, %v174
        %vm226 = vcmp.eq.f32.partialorder %v194, %v174
        %v227 = vsel %vm195, 1, 0
        %v228 = vsel %vm196, 1, 0
        %v229 = vsel %vm197, 1, 0
        %v230 = vsel %vm198, 1, 0
        %v231 = vsel %vm199, 1, 0
        %v232 = vsel %vm200, 1, 0
        %v233 = vsel %vm201, 1, 0
        %v234 = vsel %vm202, 1, 0
        %v235 = vsel %vm203, 1, 0
        %v236 = vsel %vm204, 1, 0
        %v237 = vsel %vm205, 1, 0
        %v238 = vsel %vm206, 1, 0
        %v239 = vsel %vm207, 1, 0
        %v240 = vsel %vm208, 1, 0
        %v241 = vsel %vm209, 1, 0
        %v242 = vsel %vm210, 1, 0
        %v243 = vsel %vm211, 1, 0
        %v244 = vsel %vm212, 1, 0
        %v245 = vsel %vm213, 1, 0
        %v246 = vsel %vm214, 1, 0
        %v247 = vsel %vm215, 1, 0
        %v248 = vsel %vm216, 1, 0
        %v249 = vsel %vm217, 1, 0
        %v250 = vsel %vm218, 1, 0
        %v251 = vsel %vm219, 1, 0
        %v252 = vsel %vm220, 1, 0
        %v253 = vsel %vm221, 1, 0
        %v254 = vsel %vm222, 1, 0
        %v255 = vsel %vm223, 1, 0
        %v256 = vsel %vm224, 1, 0
        %v257 = vsel %vm225, 1, 0
        %v258 = vsel %vm226, 1, 0
        %v259 = vcvt.s32.f32 %v227
        %v260 = vcvt.s32.f32 %v228
        %v261 = vcvt.s32.f32 %v229
        %v262 = vcvt.s32.f32 %v230
        %v263 = vcvt.s32.f32 %v231
        %v264 = vcvt.s32.f32 %v232
        %v265 = vcvt.s32.f32 %v233
        %v266 = vcvt.s32.f32 %v234
        %v267 = vcvt.s32.f32 %v235
        %v268 = vcvt.s32.f32 %v236
        %v269 = vcvt.s32.f32 %v237
        %v270 = vcvt.s32.f32 %v238
        %v271 = vcvt.s32.f32 %v239
        %v272 = vcvt.s32.f32 %v240
        %v273 = vcvt.s32.f32 %v241
        %v274 = vcvt.s32.f32 %v242
        %v275 = vcvt.s32.f32 %v243
        %v276 = vcvt.s32.f32 %v244
        %v277 = vcvt.s32.f32 %v245
        %v278 = vcvt.s32.f32 %v246
        %v279 = vcvt.s32.f32 %v247
        %v280 = vcvt.s32.f32 %v248
        %v281 = vcvt.s32.f32 %v249
        %v282 = vcvt.s32.f32 %v250
        %v283 = vcvt.s32.f32 %v251
        %v284 = vcvt.s32.f32 %v252
        %v285 = vcvt.s32.f32 %v253
        %v286 = vcvt.s32.f32 %v254
        %v287 = vcvt.s32.f32 %v255
        %v288 = vcvt.s32.f32 %v256
        %v289 = vcvt.s32.f32 %v257
        %v290 = vcvt.s32.f32 %v258
        %v291 = vld [vmem:[%s116] sm:$0xff]
        %v292 = vld [vmem:[%s116 + $0x8] sm:$0xff]
        %v293 = vand.u32 %v260, 4294901760
        %294 = vmatprep.subr.mxu0 %v293
        %v295 = vand.u32 %v259, 4294901760
        %296 = vmatpush1.msra.mxu0 %v295
        %v297 = vand.u32 %v262, 4294901760
        %298 = vmatprep.subr.mxu0 %v297
        %v299 = vand.u32 %v261, 4294901760
        %300 = vmatpush1.msra.mxu0 %v299
        %v301 = vand.u32 %v264, 4294901760
        %302 = vmatprep.subr.mxu0 %v301
        %v303 = vand.u32 %v263, 4294901760
        %304 = vmatpush1.msra.mxu0 %v303
        %v305 = vand.u32 %v266, 4294901760
        %306 = vmatprep.subr.mxu0 %v305
        %v307 = vand.u32 %v265, 4294901760
        %308 = vmatpush1.msra.mxu0 %v307
        %v309 = vand.u32 %v268, 4294901760
        %310 = vmatprep.subr.mxu0 %v309
        %v311 = vand.u32 %v267, 4294901760
        %312 = vmatpush1.msra.mxu0 %v311
        %v313 = vand.u32 %v270, 4294901760
        %314 = vmatprep.subr.mxu0 %v313
        %v315 = vand.u32 %v269, 4294901760
        %316 = vmatpush1.msra.mxu0 %v315
        %v317 = vand.u32 %v272, 4294901760
        %318 = vmatprep.subr.mxu0 %v317
        %v319 = vand.u32 %v271, 4294901760
        %320 = vmatpush1.msra.mxu0 %v319
        %v321 = vand.u32 %v274, 4294901760
        %322 = vmatprep.subr.mxu0 %v321
        %v323 = vand.u32 %v273, 4294901760
        %324 = vmatpush1.msra.mxu0 %v323
        %v325 = vand.u32 %v276, 4294901760
        %326 = vmatprep.subr.mxu0 %v325
        %v327 = vand.u32 %v275, 4294901760
        %328 = vmatpush1.msra.mxu0 %v327
        %v329 = vand.u32 %v278, 4294901760
        %330 = vmatprep.subr.mxu0 %v329
        %v331 = vand.u32 %v277, 4294901760
        %332 = vmatpush1.msra.mxu0 %v331
        %v333 = vand.u32 %v280, 4294901760
        %334 = vmatprep.subr.mxu0 %v333
        %v335 = vand.u32 %v279, 4294901760
        %336 = vmatpush1.msra.mxu0 %v335
        %v337 = vand.u32 %v282, 4294901760
        %338 = vmatprep.subr.mxu0 %v337
        %v339 = vand.u32 %v281, 4294901760
        %340 = vmatpush1.msra.mxu0 %v339
        %v341 = vand.u32 %v284, 4294901760
        %342 = vmatprep.subr.mxu0 %v341
        %v343 = vand.u32 %v283, 4294901760
        %344 = vmatpush1.msra.mxu0 %v343
        %v345 = vand.u32 %v286, 4294901760
        %346 = vmatprep.subr.mxu0 %v345
        %v347 = vand.u32 %v285, 4294901760
        %348 = vmatpush1.msra.mxu0 %v347
        %v349 = vand.u32 %v288, 4294901760
        %350 = vmatprep.subr.mxu0 %v349
        %v351 = vand.u32 %v287, 4294901760
        %352 = vmatpush1.msra.mxu0 %v351
        %v353 = vand.u32 %v290, 4294901760
        %354 = vmatprep.subr.mxu0 %v353
        %v355 = vand.u32 %v289, 4294901760
        %356 = vmatpush1.msra.mxu0 %v355
        %357 = vmatprep.subr.mxu0 0.0
        %358 = vmatpush1.msra.mxu0 0.0
        %359 = vmatprep.subr.mxu0 0.0
        %360 = vmatpush1.msra.mxu0 0.0
        %361 = vmatprep.subr.mxu0 0.0
        %362 = vmatpush1.msra.mxu0 0.0
        %363 = vmatprep.subr.mxu0 0.0
        %364 = vmatpush1.msra.mxu0 0.0
        %365 = vmatprep.subr.mxu0 0.0
        %366 = vmatpush1.msra.mxu0 0.0
        %367 = vmatprep.subr.mxu0 0.0
        %368 = vmatpush1.msra.mxu0 0.0
        %369 = vmatprep.subr.mxu0 0.0
        %370 = vmatpush1.msra.mxu0 0.0
        %371 = vmatprep.subr.mxu0 0.0
        %372 = vmatpush1.msra.mxu0 0.0
        %373 = vmatprep.subr.mxu0 0.0
        %374 = vmatpush1.msra.mxu0 0.0
        %375 = vmatprep.subr.mxu0 0.0
        %376 = vmatpush1.msra.mxu0 0.0
        %377 = vmatprep.subr.mxu0 0.0
        %378 = vmatpush1.msra.mxu0 0.0
        %379 = vmatprep.subr.mxu0 0.0
        %380 = vmatpush1.msra.mxu0 0.0
        %381 = vmatprep.subr.mxu0 0.0
        %382 = vmatpush1.msra.mxu0 0.0
        %383 = vmatprep.subr.mxu0 0.0
        %384 = vmatpush1.msra.mxu0 0.0
        %385 = vmatprep.subr.mxu0 0.0
        %386 = vmatpush1.msra.mxu0 0.0
        %387 = vmatprep.subr.mxu0 0.0
        %388 = vmatpush1.msra.mxu0 0.0
        %389 = vmatprep.mubr.f32.mxu0 0.0
        %v390 = vand.u32 %v291, 4294901760
        %v391 = vsub.f32 %v291, %v390
        %v392 = vand.u32 %v391, 4294901760
        %v393 = vsub.f32 %v391, %v392
        %v394 = vand.u32 %v393, 4294901760
        %395 = vmatmul.mubr.f32.gmra.mrb[0].mxu0 %v394
        %v396 = vpop.f32.mrb[0].mxu0
        %v397 = vadd.f32 0.0, %v396
        %v398 = vpop.f32.mrb[0].mxu0
        %v399 = vadd.f32 0.0, %v398
        %400 = vmatprep.mubr.f32.mxu0 0.0
        %v401 = vand.u32 %v292, 4294901760
        %v402 = vsub.f32 %v292, %v401
        %v403 = vand.u32 %v402, 4294901760
        %v404 = vsub.f32 %v402, %v403
        %v405 = vand.u32 %v404, 4294901760
        %406 = vmatmul.mubr.f32.gmra.mrb[0].mxu0 %v405
        %v407 = vpop.f32.mrb[0].mxu0
        %v408 = vadd.f32 0.0, %v407
        %v409 = vpop.f32.mrb[0].mxu0
        %v410 = vadd.f32 0.0, %v409
        %411 = vdwg.mxu0
        %v412 = vand.u32 %v260, 4294901760
        %v413 = vsub.f32 %v260, %v412
        %v414 = vand.u32 %v413, 4294901760
        %v415 = vsub.f32 %v413, %v414
        %v416 = vand.u32 %v415, 4294901760
        %417 = vmatprep.subr.mxu0 %v416
        %v418 = vand.u32 %v259, 4294901760
        %v419 = vsub.f32 %v259, %v418
        %v420 = vand.u32 %v419, 4294901760
        %v421 = vsub.f32 %v419, %v420
        %v422 = vand.u32 %v421, 4294901760
        %423 = vmatpush1.msra.mxu0 %v422
        %v424 = vand.u32 %v262, 4294901760
        %v425 = vsub.f32 %v262, %v424
        %v426 = vand.u32 %v425, 4294901760
        %v427 = vsub.f32 %v425, %v426
        %v428 = vand.u32 %v427, 4294901760
        %429 = vmatprep.subr.mxu0 %v428
        %v430 = vand.u32 %v261, 4294901760
        %v431 = vsub.f32 %v261, %v430
        %v432 = vand.u32 %v431, 4294901760
        %v433 = vsub.f32 %v431, %v432
        %v434 = vand.u32 %v433, 4294901760
        %435 = vmatpush1.msra.mxu0 %v434
        %v436 = vand.u32 %v264, 4294901760
        %v437 = vsub.f32 %v264, %v436
        %v438 = vand.u32 %v437, 4294901760
        %v439 = vsub.f32 %v437, %v438
        %v440 = vand.u32 %v439, 4294901760
        %441 = vmatprep.subr.mxu0 %v440
        %v442 = vand.u32 %v263, 4294901760
        %v443 = vsub.f32 %v263, %v442
        %v444 = vand.u32 %v443, 4294901760
        %v445 = vsub.f32 %v443, %v444
        %v446 = vand.u32 %v445, 4294901760
        %447 = vmatpush1.msra.mxu0 %v446
        %v448 = vand.u32 %v266, 4294901760
        %v449 = vsub.f32 %v266, %v448
        %v450 = vand.u32 %v449, 4294901760
        %v451 = vsub.f32 %v449, %v450
        %v452 = vand.u32 %v451, 4294901760
        %453 = vmatprep.subr.mxu0 %v452
        %v454 = vand.u32 %v265, 4294901760
        %v455 = vsub.f32 %v265, %v454
        %v456 = vand.u32 %v455, 4294901760
        %v457 = vsub.f32 %v455, %v456
        %v458 = vand.u32 %v457, 4294901760
        %459 = vmatpush1.msra.mxu0 %v458
        %v460 = vand.u32 %v268, 4294901760
        %v461 = vsub.f32 %v268, %v460
        %v462 = vand.u32 %v461, 4294901760
        %v463 = vsub.f32 %v461, %v462
        %v464 = vand.u32 %v463, 4294901760
        %465 = vmatprep.subr.mxu0 %v464
        %v466 = vand.u32 %v267, 4294901760
        %v467 = vsub.f32 %v267, %v466
        %v468 = vand.u32 %v467, 4294901760
        %v469 = vsub.f32 %v467, %v468
        %v470 = vand.u32 %v469, 4294901760
        %471 = vmatpush1.msra.mxu0 %v470
        %v472 = vand.u32 %v270, 4294901760
        %v473 = vsub.f32 %v270, %v472
        %v474 = vand.u32 %v473, 4294901760
        %v475 = vsub.f32 %v473, %v474
        %v476 = vand.u32 %v475, 4294901760
        %477 = vmatprep.subr.mxu0 %v476
        %v478 = vand.u32 %v269, 4294901760
        %v479 = vsub.f32 %v269, %v478
        %v480 = vand.u32 %v479, 4294901760
        %v481 = vsub.f32 %v479, %v480
        %v482 = vand.u32 %v481, 4294901760
        %483 = vmatpush1.msra.mxu0 %v482
        %v484 = vand.u32 %v272, 4294901760
        %v485 = vsub.f32 %v272, %v484
        %v486 = vand.u32 %v485, 4294901760
        %v487 = vsub.f32 %v485, %v486
        %v488 = vand.u32 %v487, 4294901760
        %489 = vmatprep.subr.mxu0 %v488
        %v490 = vand.u32 %v271, 4294901760
        %v491 = vsub.f32 %v271, %v490
        %v492 = vand.u32 %v491, 4294901760
        %v493 = vsub.f32 %v491, %v492
        %v494 = vand.u32 %v493, 4294901760
        %495 = vmatpush1.msra.mxu0 %v494
        %v496 = vand.u32 %v274, 4294901760
        %v497 = vsub.f32 %v274, %v496
        %v498 = vand.u32 %v497, 4294901760
        %v499 = vsub.f32 %v497, %v498
        %v500 = vand.u32 %v499, 4294901760
        %501 = vmatprep.subr.mxu0 %v500
        %v502 = vand.u32 %v273, 4294901760
        %v503 = vsub.f32 %v273, %v502
        %v504 = vand.u32 %v503, 4294901760
        %v505 = vsub.f32 %v503, %v504
        %v506 = vand.u32 %v505, 4294901760
        %507 = vmatpush1.msra.mxu0 %v506
        %v508 = vand.u32 %v276, 4294901760
        %v509 = vsub.f32 %v276, %v508
        %v510 = vand.u32 %v509, 4294901760
        %v511 = vsub.f32 %v509, %v510
        %v512 = vand.u32 %v511, 4294901760
        %513 = vmatprep.subr.mxu0 %v512
        %v514 = vand.u32 %v275, 4294901760
        %v515 = vsub.f32 %v275, %v514
        %v516 = vand.u32 %v515, 4294901760
        %v517 = vsub.f32 %v515, %v516
        %v518 = vand.u32 %v517, 4294901760
        %519 = vmatpush1.msra.mxu0 %v518
        %v520 = vand.u32 %v278, 4294901760
        %v521 = vsub.f32 %v278, %v520
        %v522 = vand.u32 %v521, 4294901760
        %v523 = vsub.f32 %v521, %v522
        %v524 = vand.u32 %v523, 4294901760
        %525 = vmatprep.subr.mxu0 %v524
        %v526 = vand.u32 %v277, 4294901760
        %v527 = vsub.f32 %v277, %v526
        %v528 = vand.u32 %v527, 4294901760
        %v529 = vsub.f32 %v527, %v528
        %v530 = vand.u32 %v529, 4294901760
        %531 = vmatpush1.msra.mxu0 %v530
        %v532 = vand.u32 %v280, 4294901760
        %v533 = vsub.f32 %v280, %v532
        %v534 = vand.u32 %v533, 4294901760
        %v535 = vsub.f32 %v533, %v534
        %v536 = vand.u32 %v535, 4294901760
        %537 = vmatprep.subr.mxu0 %v536
        %v538 = vand.u32 %v279, 4294901760
        %v539 = vsub.f32 %v279, %v538
        %v540 = vand.u32 %v539, 4294901760
        %v541 = vsub.f32 %v539, %v540
        %v542 = vand.u32 %v541, 4294901760
        %543 = vmatpush1.msra.mxu0 %v542
        %v544 = vand.u32 %v282, 4294901760
        %v545 = vsub.f32 %v282, %v544
        %v546 = vand.u32 %v545, 4294901760
        %v547 = vsub.f32 %v545, %v546
        %v548 = vand.u32 %v547, 4294901760
        %549 = vmatprep.subr.mxu0 %v548
        %v550 = vand.u32 %v281, 4294901760
        %v551 = vsub.f32 %v281, %v550
        %v552 = vand.u32 %v551, 4294901760
        %v553 = vsub.f32 %v551, %v552
        %v554 = vand.u32 %v553, 4294901760
        %555 = vmatpush1.msra.mxu0 %v554
        %v556 = vand.u32 %v284, 4294901760
        %v557 = vsub.f32 %v284, %v556
        %v558 = vand.u32 %v557, 4294901760
        %v559 = vsub.f32 %v557, %v558
        %v560 = vand.u32 %v559, 4294901760
        %561 = vmatprep.subr.mxu0 %v560
        %v562 = vand.u32 %v283, 4294901760
        %v563 = vsub.f32 %v283, %v562
        %v564 = vand.u32 %v563, 4294901760
        %v565 = vsub.f32 %v563, %v564
        %v566 = vand.u32 %v565, 4294901760
        %567 = vmatpush1.msra.mxu0 %v566
        %v568 = vand.u32 %v286, 4294901760
        %v569 = vsub.f32 %v286, %v568
        %v570 = vand.u32 %v569, 4294901760
        %v571 = vsub.f32 %v569, %v570
        %v572 = vand.u32 %v571, 4294901760
        %573 = vmatprep.subr.mxu0 %v572
        %v574 = vand.u32 %v285, 4294901760
        %v575 = vsub.f32 %v285, %v574
        %v576 = vand.u32 %v575, 4294901760
        %v577 = vsub.f32 %v575, %v576
        %v578 = vand.u32 %v577, 4294901760
        %579 = vmatpush1.msra.mxu0 %v578
        %v580 = vand.u32 %v288, 4294901760
        %v581 = vsub.f32 %v288, %v580
        %v582 = vand.u32 %v581, 4294901760
        %v583 = vsub.f32 %v581, %v582
        %v584 = vand.u32 %v583, 4294901760
        %585 = vmatprep.subr.mxu0 %v584
        %v586 = vand.u32 %v287, 4294901760
        %v587 = vsub.f32 %v287, %v586
        %v588 = vand.u32 %v587, 4294901760
        %v589 = vsub.f32 %v587, %v588
        %v590 = vand.u32 %v589, 4294901760
        %591 = vmatpush1.msra.mxu0 %v590
        %v592 = vand.u32 %v290, 4294901760
        %v593 = vsub.f32 %v290, %v592
        %v594 = vand.u32 %v593, 4294901760
        %v595 = vsub.f32 %v593, %v594
        %v596 = vand.u32 %v595, 4294901760
        %597 = vmatprep.subr.mxu0 %v596
        %v598 = vand.u32 %v289, 4294901760
        %v599 = vsub.f32 %v289, %v598
        %v600 = vand.u32 %v599, 4294901760
        %v601 = vsub.f32 %v599, %v600
        %v602 = vand.u32 %v601, 4294901760
        %603 = vmatpush1.msra.mxu0 %v602
        %604 = vmatprep.subr.mxu0 0.0
        %605 = vmatpush1.msra.mxu0 0.0
        %606 = vmatprep.subr.mxu0 0.0
        %607 = vmatpush1.msra.mxu0 0.0
        %608 = vmatprep.subr.mxu0 0.0
        %609 = vmatpush1.msra.mxu0 0.0
        %610 = vmatprep.subr.mxu0 0.0
        %611 = vmatpush1.msra.mxu0 0.0
        %612 = vmatprep.subr.mxu0 0.0
        %613 = vmatpush1.msra.mxu0 0.0
        %614 = vmatprep.subr.mxu0 0.0
        %615 = vmatpush1.msra.mxu0 0.0
        %616 = vmatprep.subr.mxu0 0.0
        %617 = vmatpush1.msra.mxu0 0.0
        %618 = vmatprep.subr.mxu0 0.0
        %619 = vmatpush1.msra.mxu0 0.0
        %620 = vmatprep.subr.mxu0 0.0
        %621 = vmatpush1.msra.mxu0 0.0
        %622 = vmatprep.subr.mxu0 0.0
        %623 = vmatpush1.msra.mxu0 0.0
        %624 = vmatprep.subr.mxu0 0.0
        %625 = vmatpush1.msra.mxu0 0.0
        %626 = vmatprep.subr.mxu0 0.0
        %627 = vmatpush1.msra.mxu0 0.0
        %628 = vmatprep.subr.mxu0 0.0
        %629 = vmatpush1.msra.mxu0 0.0
        %630 = vmatprep.subr.mxu0 0.0
        %631 = vmatpush1.msra.mxu0 0.0
        %632 = vmatprep.subr.mxu0 0.0
        %633 = vmatpush1.msra.mxu0 0.0
        %634 = vmatprep.subr.mxu0 0.0
        %635 = vmatpush1.msra.mxu0 0.0
        %636 = vmatprep.mubr.f32.mxu0 0.0
        %v637 = vand.u32 %v291, 4294901760
        %638 = vmatmul.mubr.f32.gmra.mrb[0].mxu0 %v637
        %v639 = vpop.f32.mrb[0].mxu0
        %v640 = vadd.f32 %v397, %v639
        %v641 = vpop.f32.mrb[0].mxu0
        %v642 = vadd.f32 %v399, %v641
        %643 = vmatprep.mubr.f32.mxu0 0.0
        %v644 = vand.u32 %v292, 4294901760
        %645 = vmatmul.mubr.f32.gmra.mrb[0].mxu0 %v644
        %v646 = vpop.f32.mrb[0].mxu0
        %v647 = vadd.f32 %v408, %v646
        %v648 = vpop.f32.mrb[0].mxu0
        %v649 = vadd.f32 %v410, %v648
        %650 = vdwg.mxu0
        %v651 = vand.u32 %v260, 4294901760
        %v652 = vsub.f32 %v260, %v651
        %653 = vmatprep.subr.mxu0 %v652
        %v654 = vand.u32 %v259, 4294901760
        %v655 = vsub.f32 %v259, %v654
        %656 = vmatpush1.msra.mxu0 %v655
        %v657 = vand.u32 %v262, 4294901760
        %v658 = vsub.f32 %v262, %v657
        %659 = vmatprep.subr.mxu0 %v658
        %v660 = vand.u32 %v261, 4294901760
        %v661 = vsub.f32 %v261, %v660
        %662 = vmatpush1.msra.mxu0 %v661
        %v663 = vand.u32 %v264, 4294901760
        %v664 = vsub.f32 %v264, %v663
        %665 = vmatprep.subr.mxu0 %v664
        %v666 = vand.u32 %v263, 4294901760
        %v667 = vsub.f32 %v263, %v666
        %668 = vmatpush1.msra.mxu0 %v667
        %v669 = vand.u32 %v266, 4294901760
        %v670 = vsub.f32 %v266, %v669
        %671 = vmatprep.subr.mxu0 %v670
        %v672 = vand.u32 %v265, 4294901760
        %v673 = vsub.f32 %v265, %v672
        %674 = vmatpush1.msra.mxu0 %v673
        %v675 = vand.u32 %v268, 4294901760
        %v676 = vsub.f32 %v268, %v675
        %677 = vmatprep.subr.mxu0 %v676
        %v678 = vand.u32 %v267, 4294901760
        %v679 = vsub.f32 %v267, %v678
        %680 = vmatpush1.msra.mxu0 %v679
        %v681 = vand.u32 %v270, 4294901760
        %v682 = vsub.f32 %v270, %v681
        %683 = vmatprep.subr.mxu0 %v682
        %v684 = vand.u32 %v269, 4294901760
        %v685 = vsub.f32 %v269, %v684
        %686 = vmatpush1.msra.mxu0 %v685
        %v687 = vand.u32 %v272, 4294901760
        %v688 = vsub.f32 %v272, %v687
        %689 = vmatprep.subr.mxu0 %v688
        %v690 = vand.u32 %v271, 4294901760
        %v691 = vsub.f32 %v271, %v690
        %692 = vmatpush1.msra.mxu0 %v691
        %v693 = vand.u32 %v274, 4294901760
        %v694 = vsub.f32 %v274, %v693
        %695 = vmatprep.subr.mxu0 %v694
        %v696 = vand.u32 %v273, 4294901760
        %v697 = vsub.f32 %v273, %v696
        %698 = vmatpush1.msra.mxu0 %v697
        %v699 = vand.u32 %v276, 4294901760
        %v700 = vsub.f32 %v276, %v699
        %701 = vmatprep.subr.mxu0 %v700
        %v702 = vand.u32 %v275, 4294901760
        %v703 = vsub.f32 %v275, %v702
        %704 = vmatpush1.msra.mxu0 %v703
        %v705 = vand.u32 %v278, 4294901760
        %v706 = vsub.f32 %v278, %v705
        %707 = vmatprep.subr.mxu0 %v706
        %v708 = vand.u32 %v277, 4294901760
        %v709 = vsub.f32 %v277, %v708
        %710 = vmatpush1.msra.mxu0 %v709
        %v711 = vand.u32 %v280, 4294901760
        %v712 = vsub.f32 %v280, %v711
        %713 = vmatprep.subr.mxu0 %v712
        %v714 = vand.u32 %v279, 4294901760
        %v715 = vsub.f32 %v279, %v714
        %716 = vmatpush1.msra.mxu0 %v715
        %v717 = vand.u32 %v282, 4294901760
        %v718 = vsub.f32 %v282, %v717
        %719 = vmatprep.subr.mxu0 %v718
        %v720 = vand.u32 %v281, 4294901760
        %v721 = vsub.f32 %v281, %v720
        %722 = vmatpush1.msra.mxu0 %v721
        %v723 = vand.u32 %v284, 4294901760
        %v724 = vsub.f32 %v284, %v723
        %725 = vmatprep.subr.mxu0 %v724
        %v726 = vand.u32 %v283, 4294901760
        %v727 = vsub.f32 %v283, %v726
        %728 = vmatpush1.msra.mxu0 %v727
        %v729 = vand.u32 %v286, 4294901760
        %v730 = vsub.f32 %v286, %v729
        %731 = vmatprep.subr.mxu0 %v730
        %v732 = vand.u32 %v285, 4294901760
        %v733 = vsub.f32 %v285, %v732
        %734 = vmatpush1.msra.mxu0 %v733
        %v735 = vand.u32 %v288, 4294901760
        %v736 = vsub.f32 %v288, %v735
        %737 = vmatprep.subr.mxu0 %v736
        %v738 = vand.u32 %v287, 4294901760
        %v739 = vsub.f32 %v287, %v738
        %740 = vmatpush1.msra.mxu0 %v739
        %v741 = vand.u32 %v290, 4294901760
        %v742 = vsub.f32 %v290, %v741
        %743 = vmatprep.subr.mxu0 %v742
        %v744 = vand.u32 %v289, 4294901760
        %v745 = vsub.f32 %v289, %v744
        %746 = vmatpush1.msra.mxu0 %v745
        %747 = vmatprep.subr.mxu0 0.0
        %748 = vmatpush1.msra.mxu0 0.0
        %749 = vmatprep.subr.mxu0 0.0
        %750 = vmatpush1.msra.mxu0 0.0
        %751 = vmatprep.subr.mxu0 0.0
        %752 = vmatpush1.msra.mxu0 0.0
        %753 = vmatprep.subr.mxu0 0.0
        %754 = vmatpush1.msra.mxu0 0.0
        %755 = vmatprep.subr.mxu0 0.0
        %756 = vmatpush1.msra.mxu0 0.0
        %757 = vmatprep.subr.mxu0 0.0
        %758 = vmatpush1.msra.mxu0 0.0
        %759 = vmatprep.subr.mxu0 0.0
        %760 = vmatpush1.msra.mxu0 0.0
        %761 = vmatprep.subr.mxu0 0.0
        %762 = vmatpush1.msra.mxu0 0.0
        %763 = vmatprep.subr.mxu0 0.0
        %764 = vmatpush1.msra.mxu0 0.0
        %765 = vmatprep.subr.mxu0 0.0
        %766 = vmatpush1.msra.mxu0 0.0
        %767 = vmatprep.subr.mxu0 0.0
        %768 = vmatpush1.msra.mxu0 0.0
        %769 = vmatprep.subr.mxu0 0.0
        %770 = vmatpush1.msra.mxu0 0.0
        %771 = vmatprep.subr.mxu0 0.0
        %772 = vmatpush1.msra.mxu0 0.0
        %773 = vmatprep.subr.mxu0 0.0
        %774 = vmatpush1.msra.mxu0 0.0
        %775 = vmatprep.subr.mxu0 0.0
        %776 = vmatpush1.msra.mxu0 0.0
        %777 = vmatprep.subr.mxu0 0.0
        %778 = vmatpush1.msra.mxu0 0.0
        %779 = vmatprep.mubr.f32.mxu0 0.0
        %v780 = vand.u32 %v291, 4294901760
        %v781 = vsub.f32 %v291, %v780
        %782 = vmatmul.mubr.f32.gmra.mrb[0].mxu0 %v781
        %v783 = vpop.f32.mrb[0].mxu0
        %v784 = vadd.f32 %v640, %v783
        %v785 = vpop.f32.mrb[0].mxu0
        %v786 = vadd.f32 %v642, %v785
        %787 = vmatprep.mubr.f32.mxu0 0.0
        %v788 = vand.u32 %v292, 4294901760
        %v789 = vsub.f32 %v292, %v788
        %790 = vmatmul.mubr.f32.gmra.mrb[0].mxu0 %v789
        %v791 = vpop.f32.mrb[0].mxu0
        %v792 = vadd.f32 %v647, %v791
        %v793 = vpop.f32.mrb[0].mxu0
        %v794 = vadd.f32 %v649, %v793
        %795 = vdwg.mxu0
        %v796 = vand.u32 %v260, 4294901760
        %797 = vmatprep.subr.mxu0 %v796
        %v798 = vand.u32 %v259, 4294901760
        %799 = vmatpush1.msra.mxu0 %v798
        %v800 = vand.u32 %v262, 4294901760
        %801 = vmatprep.subr.mxu0 %v800
        %v802 = vand.u32 %v261, 4294901760
        %803 = vmatpush1.msra.mxu0 %v802
        %v804 = vand.u32 %v264, 4294901760
        %805 = vmatprep.subr.mxu0 %v804
        %v806 = vand.u32 %v263, 4294901760
        %807 = vmatpush1.msra.mxu0 %v806
        %v808 = vand.u32 %v266, 4294901760
        %809 = vmatprep.subr.mxu0 %v808
        %v810 = vand.u32 %v265, 4294901760
        %811 = vmatpush1.msra.mxu0 %v810
        %v812 = vand.u32 %v268, 4294901760
        %813 = vmatprep.subr.mxu0 %v812
        %v814 = vand.u32 %v267, 4294901760
        %815 = vmatpush1.msra.mxu0 %v814
        %v816 = vand.u32 %v270, 4294901760
        %817 = vmatprep.subr.mxu0 %v816
        %v818 = vand.u32 %v269, 4294901760
        %819 = vmatpush1.msra.mxu0 %v818
        %v820 = vand.u32 %v272, 4294901760
        %821 = vmatprep.subr.mxu0 %v820
        %v822 = vand.u32 %v271, 4294901760
        %823 = vmatpush1.msra.mxu0 %v822
        %v824 = vand.u32 %v274, 4294901760
        %825 = vmatprep.subr.mxu0 %v824
        %v826 = vand.u32 %v273, 4294901760
        %827 = vmatpush1.msra.mxu0 %v826
        %v828 = vand.u32 %v276, 4294901760
        %829 = vmatprep.subr.mxu0 %v828
        %v830 = vand.u32 %v275, 4294901760
        %831 = vmatpush1.msra.mxu0 %v830
        %v832 = vand.u32 %v278, 4294901760
        %833 = vmatprep.subr.mxu0 %v832
        %v834 = vand.u32 %v277, 4294901760
        %835 = vmatpush1.msra.mxu0 %v834
        %v836 = vand.u32 %v280, 4294901760
        %837 = vmatprep.subr.mxu0 %v836
        %v838 = vand.u32 %v279, 4294901760
        %839 = vmatpush1.msra.mxu0 %v838
        %v840 = vand.u32 %v282, 4294901760
        %841 = vmatprep.subr.mxu0 %v840
        %v842 = vand.u32 %v281, 4294901760
        %843 = vmatpush1.msra.mxu0 %v842
        %v844 = vand.u32 %v284, 4294901760
        %845 = vmatprep.subr.mxu0 %v844
        %v846 = vand.u32 %v283, 4294901760
        %847 = vmatpush1.msra.mxu0 %v846
        %v848 = vand.u32 %v286, 4294901760
        %849 = vmatprep.subr.mxu0 %v848
        %v850 = vand.u32 %v285, 4294901760
        %851 = vmatpush1.msra.mxu0 %v850
        %v852 = vand.u32 %v288, 4294901760
        %853 = vmatprep.subr.mxu0 %v852
        %v854 = vand.u32 %v287, 4294901760
        %855 = vmatpush1.msra.mxu0 %v854
        %v856 = vand.u32 %v290, 4294901760
        %857 = vmatprep.subr.mxu0 %v856
        %v858 = vand.u32 %v289, 4294901760
        %859 = vmatpush1.msra.mxu0 %v858
        %860 = vmatprep.subr.mxu0 0.0
        %861 = vmatpush1.msra.mxu0 0.0
        %862 = vmatprep.subr.mxu0 0.0
        %863 = vmatpush1.msra.mxu0 0.0
        %864 = vmatprep.subr.mxu0 0.0
        %865 = vmatpush1.msra.mxu0 0.0
        %866 = vmatprep.subr.mxu0 0.0
        %867 = vmatpush1.msra.mxu0 0.0
        %868 = vmatprep.subr.mxu0 0.0
        %869 = vmatpush1.msra.mxu0 0.0
        %870 = vmatprep.subr.mxu0 0.0
        %871 = vmatpush1.msra.mxu0 0.0
        %872 = vmatprep.subr.mxu0 0.0
        %873 = vmatpush1.msra.mxu0 0.0
        %874 = vmatprep.subr.mxu0 0.0
        %875 = vmatpush1.msra.mxu0 0.0
        %876 = vmatprep.subr.mxu0 0.0
        %877 = vmatpush1.msra.mxu0 0.0
        %878 = vmatprep.subr.mxu0 0.0
        %879 = vmatpush1.msra.mxu0 0.0
        %880 = vmatprep.subr.mxu0 0.0
        %881 = vmatpush1.msra.mxu0 0.0
        %882 = vmatprep.subr.mxu0 0.0
        %883 = vmatpush1.msra.mxu0 0.0
        %884 = vmatprep.subr.mxu0 0.0
        %885 = vmatpush1.msra.mxu0 0.0
        %886 = vmatprep.subr.mxu0 0.0
        %887 = vmatpush1.msra.mxu0 0.0
        %888 = vmatprep.subr.mxu0 0.0
        %889 = vmatpush1.msra.mxu0 0.0
        %890 = vmatprep.subr.mxu0 0.0
        %891 = vmatpush1.msra.mxu0 0.0
        %892 = vmatprep.mubr.f32.mxu0 0.0
        %v893 = vand.u32 %v291, 4294901760
        %v894 = vsub.f32 %v291, %v893
        %v895 = vand.u32 %v894, 4294901760
        %896 = vmatmul.mubr.f32.gmra.mrb[0].mxu0 %v895
        %v897 = vpop.f32.mrb[0].mxu0
        %v898 = vadd.f32 %v784, %v897
        %v899 = vpop.f32.mrb[0].mxu0
        %v900 = vadd.f32 %v786, %v899
        %901 = vmatprep.mubr.f32.mxu0 0.0
        %v902 = vand.u32 %v292, 4294901760
        %v903 = vsub.f32 %v292, %v902
        %v904 = vand.u32 %v903, 4294901760
        %905 = vmatmul.mubr.f32.gmra.mrb[0].mxu0 %v904
        %v906 = vpop.f32.mrb[0].mxu0
        %v907 = vadd.f32 %v792, %v906
        %v908 = vpop.f32.mrb[0].mxu0
        %v909 = vadd.f32 %v794, %v908
        %910 = vdwg.mxu0
        %v911 = vand.u32 %v260, 4294901760
        %v912 = vsub.f32 %v260, %v911
        %v913 = vand.u32 %v912, 4294901760
        %914 = vmatprep.subr.mxu0 %v913
        %v915 = vand.u32 %v259, 4294901760
        %v916 = vsub.f32 %v259, %v915
        %v917 = vand.u32 %v916, 4294901760
        %918 = vmatpush1.msra.mxu0 %v917
        %v919 = vand.u32 %v262, 4294901760
        %v920 = vsub.f32 %v262, %v919
        %v921 = vand.u32 %v920, 4294901760
        %922 = vmatprep.subr.mxu0 %v921
        %v923 = vand.u32 %v261, 4294901760
        %v924 = vsub.f32 %v261, %v923
        %v925 = vand.u32 %v924, 4294901760
        %926 = vmatpush1.msra.mxu0 %v925
        %v927 = vand.u32 %v264, 4294901760
        %v928 = vsub.f32 %v264, %v927
        %v929 = vand.u32 %v928, 4294901760
        %930 = vmatprep.subr.mxu0 %v929
        %v931 = vand.u32 %v263, 4294901760
        %v932 = vsub.f32 %v263, %v931
        %v933 = vand.u32 %v932, 4294901760
        %934 = vmatpush1.msra.mxu0 %v933
        %v935 = vand.u32 %v266, 4294901760
        %v936 = vsub.f32 %v266, %v935
        %v937 = vand.u32 %v936, 4294901760
        %938 = vmatprep.subr.mxu0 %v937
        %v939 = vand.u32 %v265, 4294901760
        %v940 = vsub.f32 %v265, %v939
        %v941 = vand.u32 %v940, 4294901760
        %942 = vmatpush1.msra.mxu0 %v941
        %v943 = vand.u32 %v268, 4294901760
        %v944 = vsub.f32 %v268, %v943
        %v945 = vand.u32 %v944, 4294901760
        %946 = vmatprep.subr.mxu0 %v945
        %v947 = vand.u32 %v267, 4294901760
        %v948 = vsub.f32 %v267, %v947
        %v949 = vand.u32 %v948, 4294901760
        %950 = vmatpush1.msra.mxu0 %v949
        %v951 = vand.u32 %v270, 4294901760
        %v952 = vsub.f32 %v270, %v951
        %v953 = vand.u32 %v952, 4294901760
        %954 = vmatprep.subr.mxu0 %v953
        %v955 = vand.u32 %v269, 4294901760
        %v956 = vsub.f32 %v269, %v955
        %v957 = vand.u32 %v956, 4294901760
        %958 = vmatpush1.msra.mxu0 %v957
        %v959 = vand.u32 %v272, 4294901760
        %v960 = vsub.f32 %v272, %v959
        %v961 = vand.u32 %v960, 4294901760
        %962 = vmatprep.subr.mxu0 %v961
        %v963 = vand.u32 %v271, 4294901760
        %v964 = vsub.f32 %v271, %v963
        %v965 = vand.u32 %v964, 4294901760
        %966 = vmatpush1.msra.mxu0 %v965
        %v967 = vand.u32 %v274, 4294901760
        %v968 = vsub.f32 %v274, %v967
        %v969 = vand.u32 %v968, 4294901760
        %970 = vmatprep.subr.mxu0 %v969
        %v971 = vand.u32 %v273, 4294901760
        %v972 = vsub.f32 %v273, %v971
        %v973 = vand.u32 %v972, 4294901760
        %974 = vmatpush1.msra.mxu0 %v973
        %v975 = vand.u32 %v276, 4294901760
        %v976 = vsub.f32 %v276, %v975
        %v977 = vand.u32 %v976, 4294901760
        %978 = vmatprep.subr.mxu0 %v977
        %v979 = vand.u32 %v275, 4294901760
        %v980 = vsub.f32 %v275, %v979
        %v981 = vand.u32 %v980, 4294901760
        %982 = vmatpush1.msra.mxu0 %v981
        %v983 = vand.u32 %v278, 4294901760
        %v984 = vsub.f32 %v278, %v983
        %v985 = vand.u32 %v984, 4294901760
        %986 = vmatprep.subr.mxu0 %v985
        %v987 = vand.u32 %v277, 4294901760
        %v988 = vsub.f32 %v277, %v987
        %v989 = vand.u32 %v988, 4294901760
        %990 = vmatpush1.msra.mxu0 %v989
        %v991 = vand.u32 %v280, 4294901760
        %v992 = vsub.f32 %v280, %v991
        %v993 = vand.u32 %v992, 4294901760
        %994 = vmatprep.subr.mxu0 %v993
        %v995 = vand.u32 %v279, 4294901760
        %v996 = vsub.f32 %v279, %v995
        %v997 = vand.u32 %v996, 4294901760
        %998 = vmatpush1.msra.mxu0 %v997
        %v999 = vand.u32 %v282, 4294901760
        %v1000 = vsub.f32 %v282, %v999
        %v1001 = vand.u32 %v1000, 4294901760
        %1002 = vmatprep.subr.mxu0 %v1001
        %v1003 = vand.u32 %v281, 4294901760
        %v1004 = vsub.f32 %v281, %v1003
        %v1005 = vand.u32 %v1004, 4294901760
        %1006 = vmatpush1.msra.mxu0 %v1005
        %v1007 = vand.u32 %v284, 4294901760
        %v1008 = vsub.f32 %v284, %v1007
        %v1009 = vand.u32 %v1008, 4294901760
        %1010 = vmatprep.subr.mxu0 %v1009
        %v1011 = vand.u32 %v283, 4294901760
        %v1012 = vsub.f32 %v283, %v1011
        %v1013 = vand.u32 %v1012, 4294901760
        %1014 = vmatpush1.msra.mxu0 %v1013
        %v1015 = vand.u32 %v286, 4294901760
        %v1016 = vsub.f32 %v286, %v1015
        %v1017 = vand.u32 %v1016, 4294901760
        %1018 = vmatprep.subr.mxu0 %v1017
        %v1019 = vand.u32 %v285, 4294901760
        %v1020 = vsub.f32 %v285, %v1019
        %v1021 = vand.u32 %v1020, 4294901760
        %1022 = vmatpush1.msra.mxu0 %v1021
        %v1023 = vand.u32 %v288, 4294901760
        %v1024 = vsub.f32 %v288, %v1023
        %v1025 = vand.u32 %v1024, 4294901760
        %1026 = vmatprep.subr.mxu0 %v1025
        %v1027 = vand.u32 %v287, 4294901760
        %v1028 = vsub.f32 %v287, %v1027
        %v1029 = vand.u32 %v1028, 4294901760
        %1030 = vmatpush1.msra.mxu0 %v1029
        %v1031 = vand.u32 %v290, 4294901760
        %v1032 = vsub.f32 %v290, %v1031
        %v1033 = vand.u32 %v1032, 4294901760
        %1034 = vmatprep.subr.mxu0 %v1033
        %v1035 = vand.u32 %v289, 4294901760
        %v1036 = vsub.f32 %v289, %v1035
        %v1037 = vand.u32 %v1036, 4294901760
        %1038 = vmatpush1.msra.mxu0 %v1037
        %1039 = vmatprep.subr.mxu0 0.0
        %1040 = vmatpush1.msra.mxu0 0.0
        %1041 = vmatprep.subr.mxu0 0.0
        %1042 = vmatpush1.msra.mxu0 0.0
        %1043 = vmatprep.subr.mxu0 0.0
        %1044 = vmatpush1.msra.mxu0 0.0
        %1045 = vmatprep.subr.mxu0 0.0
        %1046 = vmatpush1.msra.mxu0 0.0
        %1047 = vmatprep.subr.mxu0 0.0
        %1048 = vmatpush1.msra.mxu0 0.0
        %1049 = vmatprep.subr.mxu0 0.0
        %1050 = vmatpush1.msra.mxu0 0.0
        %1051 = vmatprep.subr.mxu0 0.0
        %1052 = vmatpush1.msra.mxu0 0.0
        %1053 = vmatprep.subr.mxu0 0.0
        %1054 = vmatpush1.msra.mxu0 0.0
        %1055 = vmatprep.subr.mxu0 0.0
        %1056 = vmatpush1.msra.mxu0 0.0
        %1057 = vmatprep.subr.mxu0 0.0
        %1058 = vmatpush1.msra.mxu0 0.0
        %1059 = vmatprep.subr.mxu0 0.0
        %1060 = vmatpush1.msra.mxu0 0.0
        %1061 = vmatprep.subr.mxu0 0.0
        %1062 = vmatpush1.msra.mxu0 0.0
        %1063 = vmatprep.subr.mxu0 0.0
        %1064 = vmatpush1.msra.mxu0 0.0
        %1065 = vmatprep.subr.mxu0 0.0
        %1066 = vmatpush1.msra.mxu0 0.0
        %1067 = vmatprep.subr.mxu0 0.0
        %1068 = vmatpush1.msra.mxu0 0.0
        %1069 = vmatprep.subr.mxu0 0.0
        %1070 = vmatpush1.msra.mxu0 0.0
        %1071 = vmatprep.mubr.f32.mxu0 0.0
        %v1072 = vand.u32 %v291, 4294901760
        %1073 = vmatmul.mubr.f32.gmra.mrb[0].mxu0 %v1072
        %v1074 = vpop.f32.mrb[0].mxu0
        %v1075 = vadd.f32 %v898, %v1074
        %v1076 = vpop.f32.mrb[0].mxu0
        %v1077 = vadd.f32 %v900, %v1076
        %1078 = vmatprep.mubr.f32.mxu0 0.0
        %v1079 = vand.u32 %v292, 4294901760
        %1080 = vmatmul.mubr.f32.gmra.mrb[0].mxu0 %v1079
        %v1081 = vpop.f32.mrb[0].mxu0
        %v1082 = vadd.f32 %v907, %v1081
        %v1083 = vpop.f32.mrb[0].mxu0
        %v1084 = vadd.f32 %v909, %v1083
        %1085 = vdwg.mxu0
        %v1086 = vand.u32 %v260, 4294901760
        %1087 = vmatprep.subr.mxu0 %v1086
        %v1088 = vand.u32 %v259, 4294901760
        %1089 = vmatpush1.msra.mxu0 %v1088
        %v1090 = vand.u32 %v262, 4294901760
        %1091 = vmatprep.subr.mxu0 %v1090
        %v1092 = vand.u32 %v261, 4294901760
        %1093 = vmatpush1.msra.mxu0 %v1092
        %v1094 = vand.u32 %v264, 4294901760
        %1095 = vmatprep.subr.mxu0 %v1094
        %v1096 = vand.u32 %v263, 4294901760
        %1097 = vmatpush1.msra.mxu0 %v1096
        %v1098 = vand.u32 %v266, 4294901760
        %1099 = vmatprep.subr.mxu0 %v1098
        %v1100 = vand.u32 %v265, 4294901760
        %1101 = vmatpush1.msra.mxu0 %v1100
        %v1102 = vand.u32 %v268, 4294901760
        %1103 = vmatprep.subr.mxu0 %v1102
        %v1104 = vand.u32 %v267, 4294901760
        %1105 = vmatpush1.msra.mxu0 %v1104
        %v1106 = vand.u32 %v270, 4294901760
        %1107 = vmatprep.subr.mxu0 %v1106
        %v1108 = vand.u32 %v269, 4294901760
        %1109 = vmatpush1.msra.mxu0 %v1108
        %v1110 = vand.u32 %v272, 4294901760
        %1111 = vmatprep.subr.mxu0 %v1110
        %v1112 = vand.u32 %v271, 4294901760
        %1113 = vmatpush1.msra.mxu0 %v1112
        %v1114 = vand.u32 %v274, 4294901760
        %1115 = vmatprep.subr.mxu0 %v1114
        %v1116 = vand.u32 %v273, 4294901760
        %1117 = vmatpush1.msra.mxu0 %v1116
        %v1118 = vand.u32 %v276, 4294901760
        %1119 = vmatprep.subr.mxu0 %v1118
        %v1120 = vand.u32 %v275, 4294901760
        %1121 = vmatpush1.msra.mxu0 %v1120
        %v1122 = vand.u32 %v278, 4294901760
        %1123 = vmatprep.subr.mxu0 %v1122
        %v1124 = vand.u32 %v277, 4294901760
        %1125 = vmatpush1.msra.mxu0 %v1124
        %v1126 = vand.u32 %v280, 4294901760
        %1127 = vmatprep.subr.mxu0 %v1126
        %v1128 = vand.u32 %v279, 4294901760
        %1129 = vmatpush1.msra.mxu0 %v1128
        %v1130 = vand.u32 %v282, 4294901760
        %1131 = vmatprep.subr.mxu0 %v1130
        %v1132 = vand.u32 %v281, 4294901760
        %1133 = vmatpush1.msra.mxu0 %v1132
        %v1134 = vand.u32 %v284, 4294901760
        %1135 = vmatprep.subr.mxu0 %v1134
        %v1136 = vand.u32 %v283, 4294901760
        %1137 = vmatpush1.msra.mxu0 %v1136
        %v1138 = vand.u32 %v286, 4294901760
        %1139 = vmatprep.subr.mxu0 %v1138
        %v1140 = vand.u32 %v285, 4294901760
        %1141 = vmatpush1.msra.mxu0 %v1140
        %v1142 = vand.u32 %v288, 4294901760
        %1143 = vmatprep.subr.mxu0 %v1142
        %v1144 = vand.u32 %v287, 4294901760
        %1145 = vmatpush1.msra.mxu0 %v1144
        %v1146 = vand.u32 %v290, 4294901760
        %1147 = vmatprep.subr.mxu0 %v1146
        %v1148 = vand.u32 %v289, 4294901760
        %1149 = vmatpush1.msra.mxu0 %v1148
        %1150 = vmatprep.subr.mxu0 0.0
        %1151 = vmatpush1.msra.mxu0 0.0
        %1152 = vmatprep.subr.mxu0 0.0
        %1153 = vmatpush1.msra.mxu0 0.0
        %1154 = vmatprep.subr.mxu0 0.0
        %1155 = vmatpush1.msra.mxu0 0.0
        %1156 = vmatprep.subr.mxu0 0.0
        %1157 = vmatpush1.msra.mxu0 0.0
        %1158 = vmatprep.subr.mxu0 0.0
        %1159 = vmatpush1.msra.mxu0 0.0
        %1160 = vmatprep.subr.mxu0 0.0
        %1161 = vmatpush1.msra.mxu0 0.0
        %1162 = vmatprep.subr.mxu0 0.0
        %1163 = vmatpush1.msra.mxu0 0.0
        %1164 = vmatprep.subr.mxu0 0.0
        %1165 = vmatpush1.msra.mxu0 0.0
        %1166 = vmatprep.subr.mxu0 0.0
        %1167 = vmatpush1.msra.mxu0 0.0
        %1168 = vmatprep.subr.mxu0 0.0
        %1169 = vmatpush1.msra.mxu0 0.0
        %1170 = vmatprep.subr.mxu0 0.0
        %1171 = vmatpush1.msra.mxu0 0.0
        %1172 = vmatprep.subr.mxu0 0.0
        %1173 = vmatpush1.msra.mxu0 0.0
        %1174 = vmatprep.subr.mxu0 0.0
        %1175 = vmatpush1.msra.mxu0 0.0
        %1176 = vmatprep.subr.mxu0 0.0
        %1177 = vmatpush1.msra.mxu0 0.0
        %1178 = vmatprep.subr.mxu0 0.0
        %1179 = vmatpush1.msra.mxu0 0.0
        %1180 = vmatprep.subr.mxu0 0.0
        %1181 = vmatpush1.msra.mxu0 0.0
        %1182 = vmatprep.mubr.f32.mxu0 0.0
        %v1183 = vand.u32 %v291, 4294901760
        %1184 = vmatmul.mubr.f32.gmra.mrb[0].mxu0 %v1183
        %v1185 = vpop.f32.mrb[0].mxu0
        %v1186 = vadd.f32 %v1075, %v1185
        %v1187 = vpop.f32.mrb[0].mxu0
        %v1188 = vadd.f32 %v1077, %v1187
        %1189 = vmatprep.mubr.f32.mxu0 0.0
        %v1190 = vand.u32 %v292, 4294901760
        %1191 = vmatmul.mubr.f32.gmra.mrb[0].mxu0 %v1190
        %v1192 = vpop.f32.mrb[0].mxu0
        %v1193 = vadd.f32 %v1082, %v1192
        %v1194 = vpop.f32.mrb[0].mxu0
        %v1195 = vadd.f32 %v1084, %v1194
        %1196 = vdwg.mxu0
        %1197 = vst [vmem:[%s134] sm:$0xff] %v1186
        %1198 = vst [vmem:[%s134 + $0x8] sm:$0xff] %v1188
        %1199 = vst [vmem:[%s134 + $0x10] sm:$0xff] %v1193
        %1200 = vst [vmem:[%s134 + $0x18] sm:$0xff] %v1195
        %s1201 = sand.u32 %s52, 1
        %s1202 = scalar_lea.sflag [#allocation4], %s1201
        %s1203 = sand.u32 %s52, 1
        %s1204 = smul.addr %s1203, 32
        %s1205 = scalar_lea.vmem [#allocation5], %s1204
        // Predicated region
        $region29: #{tpu_custom_call.1} parent=23 // pred_check
          %p1206 = pneg %p62
        $region30: #{tpu_custom_call.1} parent=23 // pred_check_branch
          %1208 = sbr.rel (%p1206) target = $region32
        $region31: #{tpu_custom_call.1} parent=23 // pred_region
          %s1209 = smul.u32 2, %s18
          %s1211 = ssub.s32 512, 512
          %1212 = vsyncadd %s1202, %s1211
          %s1213 = smul.addr %s1209, 2
          %s1214 = smul.addr %s1213, 128
          %s1215 = scalar_lea.hbm %s1, %s1214
          %s1216 = sshll.u32 %s1205, 4
          %s1217 = int_to_ptr.vmem [resolvable:$true] %s1216
          %1222 = dma.vmem_to_hbm [thread:$0]  %s1217, 512, %s1215, %s1202, 256, 256, 16
        $region32: #{tpu_custom_call.1} parent=23 // pred_fallthru
          _
      $region24: #{tpu_custom_call.1} parent=5 // pred_fallthru
        _
      %p1223 = scmp.le.s32.totalorder 2, %s13
      // Predicated region
      $region33: #{tpu_custom_call.1} parent=5 // pred_check
        %p1224 = pneg %p1223
      $region34: #{tpu_custom_call.1} parent=5 // pred_check_branch
        %1226 = sbr.rel (%p1224) target = $region36
      $region35: #{tpu_custom_call.1} parent=5 // pred_region
        %s1227 = ssub.s32 %s13, 2
        // Predicated region
        $region37: #{tpu_custom_call.1} parent=35 // pred_check
          %p1228 = pneg %p68
        $region38: #{tpu_custom_call.1} parent=35 // pred_check_branch
          %1230 = sbr.rel (%p1228) target = $region40
        $region39: #{tpu_custom_call.1} parent=35 // pred_region
          %s1231 = sand.u32 %s53, 1
          %s1232 = scalar_lea.sflag [#allocation4], %s1231
          %s1233 = sand.u32 %s53, 1
          %s1234 = smul.addr %s1233, 32
          %s1235 = scalar_lea.vmem [#allocation5], %s1234
          %1236 = dma.done %s1232, 512
        $region40: #{tpu_custom_call.1} parent=35 // pred_fallthru
          _
      $region36: #{tpu_custom_call.1} parent=5 // pred_fallthru
        _
    $region6: #{tpu_custom_call.1} parent=1 // loop_footer
      %s17 = sadd.s32 1, %s13
    $region7: #{tpu_custom_call.1} parent=1 // loop_footer_branch
      %12 = sbr.rel target = $region3
    $region8: #{tpu_custom_call.1} parent=1 // loop_exit
      _
    %1237 = vsyncpa [#allocation3], 1
    %s1238 = scalar_lea.sflag [#allocation3], 1
    %1239 = vsyncpa %s1238, 1
    %1240 = vsyncpa [#allocation4], 1
    %s1241 = scalar_lea.sflag [#allocation4], 1
    %1242 = vsyncpa %s1241, 1

</llo_original>
